<compile_context>
chip_gen: v7x
topology: tpu7x:2x2x1
jax: 0.10.0
libtpu: 0.0.40
codegen_flags: <defaults>
</compile_context>

<pallas_src>
import functools

import jax
import jax.numpy as jnp
from jax import lax
from jax.experimental import pallas as pl
from jax.experimental.pallas import tpu as pltpu


_VMEM_LIMIT = 64 * 1024 * 1024    # <= v7x physical VMEM; ample for these tiles


def _pick_tile(p, pref=512):
    """Largest lane tile from {pref, 256, 128} dividing p, else the full dim."""
    for t in (pref, 256, 128):
        if p % t == 0:
            return t
    return p


# ---------------------------------------------------------------------------
# Pallas kernels
# ---------------------------------------------------------------------------

def _conv1x1_bn_relu_kernel(w_ref, b_ref, x_ref, o_ref):
    # 1x1 conv == channel matmul (bf16 MXU operands, f32 accumulation);
    # folded-BN bias + ReLU fused.  x_ref/o_ref are (C, tile_p) pixel tiles.
    y = jnp.dot(w_ref[...], x_ref[...], preferred_element_type=jnp.float32)
    o_ref[...] = jnp.maximum(y + b_ref[...], 0.0).astype(o_ref.dtype)


def conv1x1_bn_relu_pallas(w, b, x):
    """x: (N, Ci, P) bf16 -> (N, Co, P) bf16.  w: (Co, Ci) bf16, b: (Co, 1) f32."""
    n, ci, p = x.shape
    co = w.shape[0]
    tp = _pick_tile(p)
    return pl.pallas_call(
        _conv1x1_bn_relu_kernel,
        out_shape=jax.ShapeDtypeStruct((n, co, p), jnp.bfloat16),
        grid=(n, p // tp),
        in_specs=[
            pl.BlockSpec((co, ci), lambda i, j: (0, 0)),   # pinned across grid
            pl.BlockSpec((co, 1), lambda i, j: (0, 0)),    # pinned across grid
            pl.BlockSpec((pl.Squeezed(), ci, tp), lambda i, j: (i, 0, j)),
        ],
        out_specs=pl.BlockSpec((pl.Squeezed(), co, tp), lambda i, j: (i, 0, j)),
        compiler_params=pltpu.CompilerParams(
            dimension_semantics=("parallel", "parallel"),
            vmem_limit_bytes=_VMEM_LIMIT),
        cost_estimate=pl.CostEstimate(
            flops=2 * n * co * ci * p,
            transcendentals=0,
            bytes_accessed=2 * n * p * (ci + co) + 2 * co * ci + 4 * co),
    )(w, b, x)


def _adaption_kernel(w1_ref, b1_ref, w2_ref, x_ref, o_ref):
    # conv1x1 + BN(folded) + ReLU, then conv1x1 (no bias), fused in one kernel.
    h = jnp.dot(w1_ref[...], x_ref[...], preferred_element_type=jnp.float32)
    h = jnp.maximum(h + b1_ref[...], 0.0)
    o_ref[...] = jnp.dot(w2_ref[...], h.astype(w2_ref.dtype),
                         preferred_element_type=jnp.float32).astype(o_ref.dtype)


def conv_adaption_pallas(w1, b1, w2, x):
    """x: (N, Cr, P) bf16 -> (N, Kc, P) f32 (f32 so the collect kernel can
    dynamically row-index it without packed-dtype sublane slicing)."""
    n, cr, p = x.shape
    kc = w2.shape[0]
    tp = _pick_tile(p)
    return pl.pallas_call(
        _adaption_kernel,
        out_shape=jax.ShapeDtypeStruct((n, kc, p), jnp.float32),
        grid=(n, p // tp),
        in_specs=[
            pl.BlockSpec((cr, cr), lambda i, j: (0, 0)),
            pl.BlockSpec((cr, 1), lambda i, j: (0, 0)),
            pl.BlockSpec((kc, cr), lambda i, j: (0, 0)),
            pl.BlockSpec((pl.Squeezed(), cr, tp), lambda i, j: (i, 0, j)),
        ],
        out_specs=pl.BlockSpec((pl.Squeezed(), kc, tp), lambda i, j: (i, 0, j)),
        compiler_params=pltpu.CompilerParams(
            dimension_semantics=("parallel", "parallel"),
            vmem_limit_bytes=_VMEM_LIMIT),
        cost_estimate=pl.CostEstimate(
            flops=2 * n * p * (cr * cr + kc * cr),
            transcendentals=0,
            bytes_accessed=2 * n * cr * p + 4 * n * kc * p
                           + 2 * (cr * cr + kc * cr) + 4 * cr),
    )(w1, b1, w2, x)


def _collect_fused_kernel(xs_ref, ad_ref, o_ref, ca_ref, *, ws, mask_h, mask_w):
    # xs_ref: (Cr, P)       bf16 -- full spatial positions of one sample
    #                               (contraction operand; resident across col tiles)
    # ad_ref: (Kc, tile_pc) f32  -- adaption channels for this column tile
    # o_ref : (Cr, tile_pc) f32
    # ca_ref: (P, tile_pc)  f32 VMEM scratch -- the attention slab is built
    #         here and never round-trips through HBM.
    p = xs_ref.shape[1]
    kc, tile_pc = ad_ref.shape
    half_h = (mask_h - 1) // 2
    half_w = (mask_w - 1) // 2
    col0 = pl.program_id(1) * tile_pc

    # Static geometry of the PSA 'collect' mask for this column tile.
    row = lax.broadcasted_iota(jnp.int32, (p, tile_pc), 0)          # q = hi*ws+wi
    col = lax.broadcasted_iota(jnp.int32, (p, tile_pc), 1) + col0   # p = h*ws+w
    dh = row // ws - col // ws + half_h
    dw = row % ws - col % ws + half_w
    valid = (dh >= 0) & (dh < mask_h) & (dw >= 0) & (dw < mask_w)
    kmap = jnp.where(valid, dh * mask_w + dw, -1)

    # ca[q, col] = x_adaption[kmap[q, col], col]  (0 where invalid),
    # assembled with broadcast/select sweeps over the kc channels (VPU) —
    # no XLA gather, no HBM materialization of the (P, P) attention matrix.
    ca_ref[...] = jnp.zeros_like(ca_ref)

    def body(k, carry):
        a_row = ad_ref[pl.ds(k, 1), :]                    # (1, tile_pc)
        ca_ref[...] = jnp.where(kmap == k, a_row, ca_ref[...])
        return carry

    lax.fori_loop(0, kc, body, 0)

    # MXU contraction over the source positions q.
    o_ref[...] = jnp.dot(xs_ref[...], ca_ref[...].astype(xs_ref.dtype),
                         preferred_element_type=jnp.float32).astype(o_ref.dtype)


def collect_fused_pallas(xs, ad, feat_h, feat_w, ws):
    """Fused CollectAttention + per-sample matmul.

    xs: (N, Cr, P) bf16, ad: (N, Kc, P) f32  ->  (N, Cr, P) f32."""
    n, cr, p = xs.shape
    kc = ad.shape[1]
    mask_h, mask_w = feat_h, feat_w - 1
    tile_pc = 128 if p % 128 == 0 else p        # lane-dense 128-multiple cols
    kern = functools.partial(_collect_fused_kernel, ws=ws,
                             mask_h=mask_h, mask_w=mask_w)
    return pl.pallas_call(
        kern,
        out_shape=jax.ShapeDtypeStruct((n, cr, p), jnp.float32),
        grid=(n, p // tile_pc),
        in_specs=[
            pl.BlockSpec((pl.Squeezed(), cr, p), lambda i, j: (i, 0, 0)),
            pl.BlockSpec((pl.Squeezed(), kc, tile_pc), lambda i, j: (i, 0, j)),
        ],
        out_specs=pl.BlockSpec((pl.Squeezed(), cr, tile_pc),
                               lambda i, j: (i, 0, j)),
        scratch_shapes=[pltpu.VMEM((p, tile_pc), jnp.float32)],
        compiler_params=pltpu.CompilerParams(
            dimension_semantics=("parallel", "parallel"),
            vmem_limit_bytes=_VMEM_LIMIT),
        cost_estimate=pl.CostEstimate(
            flops=2 * n * cr * p * p,
            transcendentals=0,
            bytes_accessed=n * (2 * cr * p + 4 * kc * p + 4 * cr * p)),
    )(xs, ad)


# ---------------------------------------------------------------------------
# Plain-JAX glue
# ---------------------------------------------------------------------------

def bilinear_matrix(out_size, in_size):
    """Row-resampling matrix for bilinear interpolation, align_corners=True."""
    if out_size == 1:
        return jnp.zeros((1, in_size), jnp.float32).at[0, 0].set(1.0)
    src = jnp.arange(out_size, dtype=jnp.float32) * (in_size - 1) / (out_size - 1)
    lo = jnp.clip(jnp.floor(src).astype(jnp.int32), 0, in_size - 2)
    frac = src - lo.astype(jnp.float32)
    m = jnp.zeros((out_size, in_size), jnp.float32)
    m = m.at[jnp.arange(out_size), lo].add(1.0 - frac)
    m = m.at[jnp.arange(out_size), lo + 1].add(frac)
    return m


def collect_attention(x_adaption, mask_h, mask_w, hs, ws):
    # TODO(synk): CollectAttention's definition was not provided; this uses the
    # standard PSA 'collect' mask semantics (zero outside the valid window).
    # Reference path only; the Pallas path fuses this into the collect kernel.
    half_h, half_w = (mask_h - 1) // 2, (mask_w - 1) // 2
    hi = jnp.arange(hs)[:, None, None, None]
    wi = jnp.arange(ws)[None, :, None, None]
    h = jnp.arange(hs)[None, None, :, None]
    w = jnp.arange(ws)[None, None, None, :]
    dh = hi + half_h - h
    dw = wi + half_w - w
    valid = (dh >= 0) & (dh < mask_h) & (dw >= 0) & (dw < mask_w)
    k = jnp.clip(dh, 0, mask_h - 1) * mask_w + jnp.clip(dw, 0, mask_w - 1)
    k = k.reshape(hs * ws, hs, ws)
    valid = valid.reshape(hs * ws, hs, ws)
    hh = jnp.broadcast_to(jnp.arange(hs)[None, :, None], (hs * ws, hs, ws))
    ww = jnp.broadcast_to(jnp.arange(ws)[None, None, :], (hs * ws, hs, ws))
    gathered = x_adaption[:, k, hh, ww]                 # (N, Hs*Ws, Hs, Ws)
    return jnp.where(valid[None], gathered, 0.0)


# ---------------------------------------------------------------------------
# Forward pass
# ---------------------------------------------------------------------------

def collect_module_forward(x, params, use_pallas=True):
    n, cin, h, w = x.shape
    cr = params["reduced_channels"]
    feat_h, feat_w = params["feat_h"], params["feat_w"]
    hs, ws = h // 2, w // 2
    p = hs * ws
    kc = (feat_w - 1) * feat_h

    rh = bilinear_matrix(hs, h)   # F.interpolate(1/2, bilinear, align_corners=True)
    rw = bilinear_matrix(ws, w)

    if use_pallas:
        # conv_reduce: bf16 at the boundary, no wrapper transposes (free reshape).
        xb = x.astype(jnp.bfloat16).reshape(n, cin, h * w)
        y = conv1x1_bn_relu_pallas(params["w_reduce_f"].astype(jnp.bfloat16),
                                   params["b_reduce_f"], xb)         # (n,cr,hw) bf16
        y = y.reshape(n, cr, h, w)

        # bilinear 1/2 downsample (separable) in plain JAX.
        x_shrink = jnp.einsum("oh,nchw,pw->ncop", rh, y.astype(jnp.float32), rw)
        xs_bf16 = x_shrink.astype(jnp.bfloat16).reshape(n, cr, p)

        # conv_adaption: (conv1x1 + BN + ReLU) -> conv1x1, fused.
        x_adaption = conv_adaption_pallas(params["w_a1_f"].astype(jnp.bfloat16),
                                          params["b_a1_f"],
                                          params["w_a2"].astype(jnp.bfloat16),
                                          xs_bf16)                   # (n,kc,p) f32

        # CollectAttention + per-sample matmul, fused in one kernel.
        out = collect_fused_pallas(xs_bf16, x_adaption, feat_h, feat_w, ws)
    else:
        wr, br = params["w_reduce_f"], params["b_reduce_f"]
        y = jnp.maximum(jnp.einsum("oc,nchw->nohw", wr, x)
                        + br.reshape(1, cr, 1, 1), 0.0)
        x_shrink = jnp.einsum("oh,nchw,pw->ncop", rh, y, rw)
        xs_flat = x_shrink.reshape(n, cr, p)
        wa1, ba1, wa2 = params["w_a1_f"], params["b_a1_f"], params["w_a2"]
        hid = jnp.maximum(jnp.einsum("oc,ncp->nop", wa1, xs_flat) + ba1[None], 0.0)
        adap = jnp.einsum("kc,ncp->nkp", wa2, hid)
        ca = collect_attention(adap.reshape(n, kc, hs, ws),
                               feat_h, feat_w - 1, hs, ws)
        out = jnp.einsum("ncq,nqp->ncp", xs_flat, ca.reshape(n, p, p))

    # Like the original module, assumes input spatial size == (feat_h, feat_w).
    return out.reshape(n, cr, feat_h // 2, feat_w // 2)


# ---------------------------------------------------------------------------
# Deterministic parameter construction (BN folded into conv, eval semantics)
# ---------------------------------------------------------------------------

def make_params(key, in_channels, reduced_channels, feat_w, feat_h):
    ks = jax.random.split(key, 12)
    eps = 1e-5

    def fold(wconv, gamma, beta, mean, var):
        scale = gamma / jnp.sqrt(var + eps)
        return wconv * scale[:, None], (beta - mean * scale)[:, None]

    w_reduce = jax.random.normal(ks[0], (reduced_channels, in_channels)) * 0.1
    g_r = 1.0 + 0.1 * jax.random.normal(ks[1], (reduced_channels,))
    b_r = 0.1 * jax.random.normal(ks[2], (reduced_channels,))
    m_r = 0.1 * jax.random.normal(ks[3], (reduced_channels,))
    v_r = jax.random.uniform(ks[4], (reduced_channels,), minval=0.5, maxval=1.5)
    w_reduce_f, b_reduce_f = fold(w_reduce, g_r, b_r, m_r, v_r)

    w_a1 = jax.random.normal(ks[5], (reduced_channels, reduced_channels)) * 0.1
    g_a = 1.0 + 0.1 * jax.random.normal(ks[6], (reduced_channels,))
    b_a = 0.1 * jax.random.normal(ks[7], (reduced_channels,))
    m_a = 0.1 * jax.random.normal(ks[8], (reduced_channels,))
    v_a = jax.random.uniform(ks[9], (reduced_channels,), minval=0.5, maxval=1.5)
    w_a1_f, b_a1_f = fold(w_a1, g_a, b_a, m_a, v_a)

    w_a2 = jax.random.normal(ks[10], ((feat_w - 1) * feat_h, reduced_channels)) * 0.1

    return dict(
        reduced_channels=reduced_channels, feat_w=feat_w, feat_h=feat_h,
        w_reduce_f=w_reduce_f.astype(jnp.float32),
        b_reduce_f=b_reduce_f.astype(jnp.float32),
        w_a1_f=w_a1_f.astype(jnp.float32),
        b_a1_f=b_a1_f.astype(jnp.float32),
        w_a2=w_a2.astype(jnp.float32),
    )


if __name__ == "__main__":
    N, Cin, Cr = 2, 16, 16
    feat_h = feat_w = 32            # spatial size of the input feature map

    key = jax.random.PRNGKey(0)
    kx, kp = jax.random.split(key)
    x = jax.random.normal(kx, (N, Cin, feat_h, feat_w), dtype=jnp.float32)
    params = make_params(kp, Cin, Cr, feat_w, feat_h)

    out = collect_module_forward(x, params, use_pallas=True)
    out = jax.block_until_ready(out)

    ref = collect_module_forward(x, params, use_pallas=False)
    ref = jax.block_until_ready(ref)

    assert out.shape == (N, Cr, feat_h // 2, feat_w // 2), out.shape
    # bf16 MXU pipeline vs pure-f32 reference -> relaxed tolerance.
    assert jnp.allclose(out.astype(jnp.float32), ref, rtol=5e-2, atol=5e-2), \
        "mismatch vs jnp reference"
    print("KERNEL_OK")
</pallas_src>

<mosaic_0001>
module attributes {stable_mosaic.version = 11 : i64} {
  func.func @_conv1x1_bn_relu_kernel(%arg0: i32, %arg1: i32, %arg2: memref<16x16xbf16, #tpu.memory_space<vmem>>, %arg3: memref<16x1xf32, #tpu.memory_space<vmem>>, %arg4: memref<1x16x512xbf16, #tpu.memory_space<vmem>>, %arg5: memref<1x16x512xbf16, #tpu.memory_space<vmem>>) attributes {dimension_semantics = [#tpu.dimension_semantics<parallel>, #tpu.dimension_semantics<parallel>], iteration_bounds = array<i64: 2, 2>, scalar_prefetch = 0 : i64, scratch_operands = 0 : i64, tpu.core_type = #tpu.core_type<tc>, window_params = [{pipeline_mode = #tpu.pipeline_mode<synchronous>, transform_indices = @transform_0, window_bounds = array<i64: 16, 16>}, {pipeline_mode = #tpu.pipeline_mode<synchronous>, transform_indices = @transform_1, window_bounds = array<i64: 16, 1>}, {transform_indices = @transform_2, window_bounds = array<i64: 1, 16, 512>}, {transform_indices = @transform_3, window_bounds = array<i64: 1, 16, 512>}]} {
    %c0 = arith.constant 0 : index
    %c0_0 = arith.constant 0 : index
    %0 = vector.load %arg2[%c0, %c0_0] : memref<16x16xbf16, #tpu.memory_space<vmem>>, vector<16x16xbf16>
    %c0_1 = arith.constant 0 : index
    %c0_2 = arith.constant 0 : index
    %c0_3 = arith.constant 0 : index
    %1 = vector.load %arg4[%c0_1, %c0_2, %c0_3] : memref<1x16x512xbf16, #tpu.memory_space<vmem>>, vector<1x16x512xbf16>
    %2 = vector.shape_cast %1 : vector<1x16x512xbf16> to vector<16x512xbf16>
    %cst = arith.constant dense<0.000000e+00> : vector<16x512xf32>
    %3 = tpu.matmul %0, %2, %cst {dimension_numbers = #tpu.dot_dimension_numbers<[1], [0], [0], [1], [0, 0, 1, 1], [], []>} : vector<16x16xbf16>, vector<16x512xbf16>, vector<16x512xf32> -> vector<16x512xf32>
    %c0_4 = arith.constant 0 : index
    %c0_5 = arith.constant 0 : index
    %4 = vector.load %arg3[%c0_4, %c0_5] : memref<16x1xf32, #tpu.memory_space<vmem>>, vector<16x1xf32>
    %5 = vector.broadcast %4 : vector<16x1xf32> to vector<16x512xf32>
    %6 = arith.addf %3, %5 : vector<16x512xf32>
    %cst_6 = arith.constant 0.000000e+00 : f32
    %7 = vector.broadcast %cst_6 : f32 to vector<16x512xf32>
    %8 = arith.maximumf %6, %7 : vector<16x512xf32>
    %9 = arith.truncf %8 : vector<16x512xf32> to vector<16x512xbf16>
    %c0_7 = arith.constant 0 : index
    %c0_8 = arith.constant 0 : index
    %c0_9 = arith.constant 0 : index
    %10 = vector.load %arg5[%c0_7, %c0_8, %c0_9] : memref<1x16x512xbf16, #tpu.memory_space<vmem>>, vector<1x16x512xbf16>
    %11 = vector.shape_cast %10 : vector<1x16x512xbf16> to vector<16x512xbf16>
    %12 = vector.shape_cast %9 : vector<16x512xbf16> to vector<1x16x512xbf16>
    tpu.vector_store %arg5[%c0_7, %c0_8, %c0_9], %12 {strides = array<i32>} : memref<1x16x512xbf16, #tpu.memory_space<vmem>>, vector<1x16x512xbf16>,
    return
  }
  func.func @transform_0(%arg0: i32, %arg1: i32) -> (i32, i32) {
    %c0_i32 = arith.constant 0 : i32
    %c0_i32_0 = arith.constant 0 : i32
    %c0_i32_1 = arith.constant 0 : i32
    return %c0_i32, %c0_i32_0 : i32, i32
  }
  func.func @transform_1(%arg0: i32, %arg1: i32) -> (i32, i32) {
    %c0_i32 = arith.constant 0 : i32
    %c0_i32_0 = arith.constant 0 : i32
    %c0_i32_1 = arith.constant 0 : i32
    return %c0_i32, %c0_i32_0 : i32, i32
  }
  func.func @transform_2(%arg0: i32, %arg1: i32) -> (i32, i32, i32) {
    %c0_i32 = arith.constant 0 : i32
    %c0_i32_0 = arith.constant 0 : i32
    return %arg0, %c0_i32, %arg1 : i32, i32, i32
  }
  func.func @transform_3(%arg0: i32, %arg1: i32) -> (i32, i32, i32) {
    %c0_i32 = arith.constant 0 : i32
    %c0_i32_0 = arith.constant 0 : i32
    return %arg0, %c0_i32, %arg1 : i32, i32, i32
  }
}

</mosaic_0001>

<llo_original>
// kernel: tpu_custom_call.1
$region0: #{tpu_custom_call.1}
  #allocation0 [shape = 'u32[]', space=smem, size = 0x4, offset = 0x4, fixed_abs, tag = 'smem constant byte address 0x4 - core index']
  #allocation1 [shape = 'u32[144,128]{1,0:T(1,128)}', space=vmem, size = 0x12000, scoped, tag = 'internal scratch']
  %s0 = inlined_call_operand.hbm [shape: bf16[16,16], index: 0, kind: input, shape index: {}]
  %s1 = inlined_call_operand.hbm [shape: f32[16,1], index: 1, kind: input, shape index: {}]
  %s2 = inlined_call_operand.hbm [shape: bf16[2,16,1024], index: 2, kind: input, shape index: {}]
  %s3 = inlined_call_operand.hbm [shape: bf16[2,16,1024], index: 3, kind: output, shape index: {}]
  %s4 = sld [smem:[#allocation0]]
  $region57: #{tpu_custom_call.1} parent=0
    _
  %s6 = ssub.s32 1, %s4
  %s7 = scalar_select 0, %s6, %s4
  $region1: #{tpu_custom_call.1} parent=0
    #allocation2 [shape = 'u8[4096]{0}', space=vmem, size = 0x1000, scoped, tag = 'input window, operand 0, single buffered']
    #allocation3 [shape = 's32[2]{0}', space=sflag, size = 0x8, scoped, tag = 'scoped memory for tpu_custom_call.1']
    #allocation4 [shape = 's32[2]{0}', space=sflag, size = 0x8, scoped, tag = 'scoped memory for tpu_custom_call.1']
    #allocation5 [shape = 'u8[8192]{0}', space=vmem, size = 0x2000, scoped, tag = 'input window, operand 1, single buffered']
    #allocation6 [shape = 's32[1]{0}', space=sflag, size = 0x4, scoped, tag = 'scoped memory for tpu_custom_call.1']
    #allocation7 [shape = 'u8[32768]{0}', space=vmem, size = 0x8000, scoped, tag = 'input window, operand 2']
    #allocation8 [shape = 'u8[32768]{0}', space=vmem, size = 0x8000, scoped, tag = 'output window, operand 0']
    %8 = vsyncpa [#allocation3], 0
    %9 = vsyncpa [#allocation6], 0
    %10 = vsyncpa [#allocation4], 0
    %s11 = scalar_lea.sflag [#allocation4], 1
    %12 = vsyncpa %s11, 0
    loop: start=0, step=1, limit=6
    $region2: #{tpu_custom_call.1} parent=1 // loop_pre_header
      _
    $region3: #{tpu_custom_call.1} parent=1 // loop_header
      %s14 = sphi 0, %s18
      %p15 = scmp.ge.s32.totalorder %s14, 6
      %s21 = sphi 0, %s33
      %s22 = sphi 0, %s29
      %s23 = sphi 0, %s21
      %s24 = sphi 0, %s22
      %s25 = sphi 0, %s23
      %s26 = sphi 0, %s24
      %s34 = sphi 0, %s34
      %s36 = sphi 0, %s34
      %s37 = sphi 0, %s36
      %s51 = sphi 0, %s37
      %s55 = sphi 0, %s55
      %s57 = sphi 0, %s55
      %s58 = sphi 0, %s57
      %s72 = sphi 0, %s58
      %s80 = sphi 0, %s82
      %s83 = sphi 0, %s80
      %s84 = sphi 0, %s83
      %s100 = sphi 0, %s84
      %s108 = sphi 0, %s110
      %s111 = sphi 0, %s108
      %s112 = sphi 0, %s111
      %s128 = sphi 0, %s112
    $region4: #{tpu_custom_call.1} parent=1 // loop_header_branch
      %17 = sbr.rel (%p15) target = $region8
    $region5: #{tpu_custom_call.1} parent=1 // loop_body
      %s19 = ssub.s32 %s14, 1
      %s20 = ssub.s32 %s14, 2
      %s27 = sadd.s32 1, %s22
      %p28 = scmp.ge.s32.totalorder %s27, 2
      %s29 = scalar_select %p28, 0, %s27
      %s30 = sadd.s32 1, %s21
      %s31 = scalar_select %p28, %s30, %s21
      %p32 = scmp.ge.s32.totalorder %s31, 2
      %s33 = scalar_select %p32, 0, %s31
      %s35 = sadd.s32 %s34, 1
      %p38 = scmp.eq.s32.totalorder %s14, 3
      %p39 = scmp.ne.s32.totalorder %s34, %s36
      %p40 = scmp.eq.s32.totalorder %s14, 0
      %p41 = por %p39, %p40
      %p42 = scmp.ne.s32.totalorder %s34, %s36
      %p43 = scmp.eq.s32.totalorder %s19, 3
      %p44 = por %p42, %p43
      %p45 = scmp.ne.s32.totalorder %s36, %s37
      %p46 = scmp.eq.s32.totalorder %s19, 0
      %p47 = por %p45, %p46
      %p48 = scmp.ne.s32.totalorder %s36, %s37
      %p49 = scmp.eq.s32.totalorder %s20, 3
      %p50 = por %p48, %p49
      %p52 = scmp.ne.s32.totalorder %s37, %s51
      %p53 = scmp.eq.s32.totalorder %s20, 0
      %p54 = por %p52, %p53
      %s56 = sadd.s32 %s55, 1
      %p59 = scmp.eq.s32.totalorder %s14, 3
      %p60 = scmp.ne.s32.totalorder %s55, %s57
      %p61 = scmp.eq.s32.totalorder %s14, 0
      %p62 = por %p60, %p61
      %p63 = scmp.ne.s32.totalorder %s55, %s57
      %p64 = scmp.eq.s32.totalorder %s19, 3
      %p65 = por %p63, %p64
      %p66 = scmp.ne.s32.totalorder %s57, %s58
      %p67 = scmp.eq.s32.totalorder %s19, 0
      %p68 = por %p66, %p67
      %p69 = scmp.ne.s32.totalorder %s57, %s58
      %p70 = scmp.eq.s32.totalorder %s20, 3
      %p71 = por %p69, %p70
      %p73 = scmp.ne.s32.totalorder %s58, %s72
      %p74 = scmp.eq.s32.totalorder %s20, 0
      %p75 = por %p73, %p74
      %s76 = ssub.s32 %s21, %s33
      %s77 = ssub.s32 %s22, %s29
      %s78 = sor.u32 %s76, %s77
      %p79 = scmp.eq.s32.totalorder %s78, 0
      %s81 = sadd.s32 %s80, 1
      %s82 = scalar_select %p79, %s80, %s81
      %p85 = pneg %p79
      %p86 = scmp.eq.s32.totalorder %s14, 3
      %p87 = por %p85, %p86
      %p88 = scmp.ne.s32.totalorder %s80, %s83
      %p89 = scmp.eq.s32.totalorder %s14, 0
      %p90 = por %p88, %p89
      %p91 = scmp.ne.s32.totalorder %s80, %s83
      %p92 = scmp.eq.s32.totalorder %s19, 3
      %p93 = por %p91, %p92
      %p94 = scmp.ne.s32.totalorder %s83, %s84
      %p95 = scmp.eq.s32.totalorder %s19, 0
      %p96 = por %p94, %p95
      %p97 = scmp.ne.s32.totalorder %s83, %s84
      %p98 = scmp.eq.s32.totalorder %s20, 3
      %p99 = por %p97, %p98
      %p101 = scmp.ne.s32.totalorder %s84, %s100
      %p102 = scmp.eq.s32.totalorder %s20, 0
      %p103 = por %p101, %p102
      %s104 = ssub.s32 %s21, %s33
      %s105 = ssub.s32 %s22, %s29
      %s106 = sor.u32 %s104, %s105
      %p107 = scmp.eq.s32.totalorder %s106, 0
      %s109 = sadd.s32 %s108, 1
      %s110 = scalar_select %p107, %s108, %s109
      %p113 = pneg %p107
      %p114 = scmp.eq.s32.totalorder %s14, 3
      %p115 = por %p113, %p114
      %p116 = scmp.ne.s32.totalorder %s108, %s111
      %p117 = scmp.eq.s32.totalorder %s14, 0
      %p118 = por %p116, %p117
      %p119 = scmp.ne.s32.totalorder %s108, %s111
      %p120 = scmp.eq.s32.totalorder %s19, 3
      %p121 = por %p119, %p120
      %p122 = scmp.ne.s32.totalorder %s111, %s112
      %p123 = scmp.eq.s32.totalorder %s19, 0
      %p124 = por %p122, %p123
      %p125 = scmp.ne.s32.totalorder %s111, %s112
      %p126 = scmp.eq.s32.totalorder %s20, 3
      %p127 = por %p125, %p126
      %p129 = scmp.ne.s32.totalorder %s112, %s128
      %p130 = scmp.eq.s32.totalorder %s20, 0
      %p131 = por %p129, %p130
      %p132 = scmp.le.s32.totalorder 1, %s14
      %p133 = scmp.lt.s32.totalorder %s14, 5
      %p134 = pnand %p132, %p133
      %p135 = pneg %p134
      // Predicated region
      $region9: #{tpu_custom_call.1} parent=5 // pred_check
        _
      $region10: #{tpu_custom_call.1} parent=5 // pred_check_branch
        %137 = sbr.rel (%p134) target = $region12
      $region11: #{tpu_custom_call.1} parent=5 // pred_region
        %s138 = ssub.s32 %s14, 1
        // Predicated region
        $region13: #{tpu_custom_call.1} parent=11 // pred_check
          %p139 = pneg %p47
        $region14: #{tpu_custom_call.1} parent=11 // pred_check_branch
          %141 = sbr.rel (%p139) target = $region16
        $region15: #{tpu_custom_call.1} parent=11 // pred_region
          %s143 = ssub.s32 128, 128
          %144 = vsyncadd [#allocation3], %s143
          %s145 = sshll.u32 [#allocation2], 4
          %s146 = int_to_ptr.vmem [resolvable:$true] %s145
          %151 = dma.hbm_to_vmem [thread:$0]  %s0, 128, %s146, [#allocation3], 64, 64, 4
        $region16: #{tpu_custom_call.1} parent=11 // pred_fallthru
          _
        // Predicated region
        $region17: #{tpu_custom_call.1} parent=11 // pred_check
          %p152 = pneg %p68
        $region18: #{tpu_custom_call.1} parent=11 // pred_check_branch
          %154 = sbr.rel (%p152) target = $region20
        $region19: #{tpu_custom_call.1} parent=11 // pred_region
          %s156 = ssub.s32 256, 256
          %157 = vsyncadd [#allocation6], %s156
          %s158 = sshll.u32 [#allocation5], 4
          %s159 = int_to_ptr.vmem [resolvable:$true] %s158
          %164 = dma.hbm_to_vmem [thread:$0]  %s1, 256, %s159, [#allocation6], 128, 128, 8
        $region20: #{tpu_custom_call.1} parent=11 // pred_fallthru
          _
      $region12: #{tpu_custom_call.1} parent=5 // pred_fallthru
        _
      %p165 = scmp.lt.s32.totalorder %s14, 4
      // Predicated region
      $region21: #{tpu_custom_call.1} parent=5 // pred_check
        %p166 = pneg %p165
      $region22: #{tpu_custom_call.1} parent=5 // pred_check_branch
        %168 = sbr.rel (%p166) target = $region24
      $region23: #{tpu_custom_call.1} parent=5 // pred_region
        // Predicated region
        $region25: #{tpu_custom_call.1} parent=23 // pred_check
          %p169 = pneg %p90
        $region26: #{tpu_custom_call.1} parent=23 // pred_check_branch
          %171 = sbr.rel (%p169) target = $region28
        $region27: #{tpu_custom_call.1} parent=23 // pred_region
          %s172 = sand.u32 %s14, 1
          %s173 = scalar_lea.sflag [#allocation3], %s172
          %s174 = sand.u32 %s80, 1
          %s175 = smul.addr %s174, 32
          %s176 = scalar_lea.vmem [#allocation7], %s175
          %s177 = smul.u32 4, %s22
          %s179 = ssub.s32 512, 512
          %180 = vsyncadd %s173, %s179
          %s181 = smul.addr %s21, 16
          %s182 = sadd.s32 %s177, %s181
          %s183 = smul.addr %s182, 64
          %s184 = scalar_lea.hbm %s2, %s183
          %s185 = sshll.u32 %s176, 4
          %s186 = int_to_ptr.vmem [resolvable:$true] %s185
          %191 = dma.hbm_to_vmem [thread:$0]  %s184, 512, %s186, %s173, 512, 256, 16
        $region28: #{tpu_custom_call.1} parent=23 // pred_fallthru
          _
      $region24: #{tpu_custom_call.1} parent=5 // pred_fallthru
        _
      %p192 = scmp.le.s32.totalorder 1, %s14
      %p193 = scmp.lt.s32.totalorder %s14, 5
      %p194 = pnand %p192, %p193
      %p195 = pneg %p194
      // Predicated region
      $region29: #{tpu_custom_call.1} parent=5 // pred_check
        _
      $region30: #{tpu_custom_call.1} parent=5 // pred_check_branch
        %197 = sbr.rel (%p194) target = $region32
      $region31: #{tpu_custom_call.1} parent=5 // pred_region
        %s198 = ssub.s32 %s14, 1
        // Predicated region
        $region33: #{tpu_custom_call.1} parent=31 // pred_check
          %p199 = pneg %p47
        $region34: #{tpu_custom_call.1} parent=31 // pred_check_branch
          %201 = sbr.rel (%p199) target = $region36
        $region35: #{tpu_custom_call.1} parent=31 // pred_region
          %202 = dma.done [#allocation3], 128
        $region36: #{tpu_custom_call.1} parent=31 // pred_fallthru
          _
        // Predicated region
        $region37: #{tpu_custom_call.1} parent=31 // pred_check
          %p203 = pneg %p68
        $region38: #{tpu_custom_call.1} parent=31 // pred_check_branch
          %205 = sbr.rel (%p203) target = $region40
        $region39: #{tpu_custom_call.1} parent=31 // pred_region
          %206 = dma.done [#allocation6], 256
        $region40: #{tpu_custom_call.1} parent=31 // pred_fallthru
          _
        %s207 = sand.u32 %s19, 1
        %s208 = scalar_lea.sflag [#allocation3], %s207
        %s209 = sand.u32 %s83, 1
        %s210 = smul.addr %s209, 32
        %s211 = scalar_lea.vmem [#allocation7], %s210
        // Predicated region
        $region41: #{tpu_custom_call.1} parent=31 // pred_check
          %p212 = pneg %p96
        $region42: #{tpu_custom_call.1} parent=31 // pred_check_branch
          %214 = sbr.rel (%p212) target = $region44
        $region43: #{tpu_custom_call.1} parent=31 // pred_region
          %215 = dma.done %s208, 512
        $region44: #{tpu_custom_call.1} parent=31 // pred_fallthru
          _
        %p216 = pneg %p47
        %p217 = pneg %p44
        %p218 = pneg %p68
        %p219 = pneg %p65
        %s220 = sand.u32 %s19, 1
        %s221 = scalar_lea.sflag [#allocation3], %s220
        %s222 = sand.u32 %s83, 1
        %s223 = smul.addr %s222, 32
        %s224 = scalar_lea.vmem [#allocation7], %s223
        %p225 = pneg %p96
        %p226 = pneg %p93
        %p227 = pneg %p124
        %p228 = pneg %p121
        %s229 = sand.u32 %s111, 1
        %s230 = scalar_lea.sflag [#allocation4], %s229
        %s231 = sand.u32 %s111, 1
        %s232 = smul.addr %s231, 32
        %s233 = scalar_lea.vmem [#allocation8], %s232
        %s234 = smul.u32 4, %s24
        %s235 = smul.u32 4, %s24
        %v237 = vld [vmem:[#allocation2] sm:$0xf]
        %v238 = vld [vmem:[#allocation2 + $0x4] sm:$0xf]
        %v239 = vld [vmem:[%s211] sm:$0xff]
        %v240 = vld [vmem:[%s211 + $0x8] sm:$0xff]
        %v241 = vld [vmem:[%s211 + $0x10] sm:$0xff]
        %v242 = vld [vmem:[%s211 + $0x18] sm:$0xff]
        %v243 = vld [vmem:[#allocation5] sm:$0xff]
        %v244 = vld [vmem:[#allocation5 + $0x8] sm:$0xff]
        %246 = vset.pattern.permute.xlu0 0
        %247 = vperm.xlu0 %246, %v243
        %v248 = vpop.permute.xlu0 %247
        %251 = vset.pattern.permute.xlu0 0
        %252 = vperm.xlu0 %251, %v244
        %v253 = vpop.permute.xlu0 %252
        %v257 = vunpack.c.l.b16 %v237
        %v258 = vunpack.c.l.b16 %v238
        %v259 = vpack.c.b16 %v258, %v257
        %v264 = vunpack.c.l.b16 %v239
        %v265 = vunpack.c.h.b16 %v239
        %v266 = vunpack.c.l.b16 %v240
        %v267 = vunpack.c.h.b16 %v240
        %v268 = vunpack.c.l.b16 %v241
        %v269 = vunpack.c.h.b16 %v241
        %v270 = vunpack.c.l.b16 %v242
        %v271 = vunpack.c.h.b16 %v242
        %v272 = vpack.c.b16 %v268, %v264
        %v273 = vpack.c.b16 %v269, %v265
        %v274 = vpack.c.b16 %v270, %v266
        %v275 = vpack.c.b16 %v271, %v267
        %vm280 = vcmask 130048
        %v282 = vsel %vm280, %v259, 0
        %284 = vmatprep.subr.bf16.mxu0 %v273
        %285 = vmatpush1.bf16.msra.mxu0 %v272
        %286 = vmatprep.subr.bf16.mxu0 0
        %287 = vmatpush1.bf16.msra.mxu0 0
        %288 = vmatprep.subr.bf16.mxu0 0
        %289 = vmatpush1.bf16.msra.mxu0 0
        %290 = vmatprep.subr.bf16.mxu0 0
        %291 = vmatpush1.bf16.msra.mxu0 0
        %292 = vmatprep.subr.bf16.mxu0 0
        %293 = vmatpush1.bf16.msra.mxu0 0
        %294 = vmatprep.subr.bf16.mxu0 0
        %295 = vmatpush1.bf16.msra.mxu0 0
        %296 = vmatprep.subr.bf16.mxu0 0
        %297 = vmatpush1.bf16.msra.mxu0 0
        %298 = vmatprep.subr.bf16.mxu0 0
        %299 = vmatpush1.bf16.msra.mxu0 0
        %300 = vmatprep.subr.bf16.mxu0 0
        %301 = vmatpush1.bf16.msra.mxu0 0
        %302 = vmatprep.subr.bf16.mxu0 0
        %303 = vmatpush1.bf16.msra.mxu0 0
        %304 = vmatprep.subr.bf16.mxu0 0
        %305 = vmatpush1.bf16.msra.mxu0 0
        %306 = vmatprep.subr.bf16.mxu0 0
        %307 = vmatpush1.bf16.msra.mxu0 0
        %308 = vmatprep.subr.bf16.mxu0 0
        %309 = vmatpush1.bf16.msra.mxu0 0
        %310 = vmatprep.subr.bf16.mxu0 0
        %311 = vmatpush1.bf16.msra.mxu0 0
        %312 = vmatprep.subr.bf16.mxu0 0
        %313 = vmatpush1.bf16.msra.mxu0 0
        %314 = vmatprep.subr.bf16.mxu0 0
        %315 = vmatpush1.bf16.msra.mxu0 0
        %316 = vmatprep.mubr.bf16.mxu0 0
        %317 = vmatmul.mubr.bf16.gmra.mrb[0].mxu0 %v282
        %v318 = vpop.f32.mrb[0].mxu0
        %v319 = vadd.f32 %v248, %v318
        %v320 = vpop.f32.mrb[0].mxu0
        %v321 = vadd.f32 %v248, %v320
        %v322 = vpop.f32.mrb[0].mxu0
        %v323 = vadd.f32 %v253, %v322
        %v324 = vpop.f32.mrb[0].mxu0
        %v325 = vadd.f32 %v253, %v324
        %326 = vdwg.mxu0
        %327 = vmatprep.subr.bf16.mxu0 %v275
        %328 = vmatpush1.bf16.msra.mxu0 %v274
        %329 = vmatprep.subr.bf16.mxu0 0
        %330 = vmatpush1.bf16.msra.mxu0 0
        %331 = vmatprep.subr.bf16.mxu0 0
        %332 = vmatpush1.bf16.msra.mxu0 0
        %333 = vmatprep.subr.bf16.mxu0 0
        %334 = vmatpush1.bf16.msra.mxu0 0
        %335 = vmatprep.subr.bf16.mxu0 0
        %336 = vmatpush1.bf16.msra.mxu0 0
        %337 = vmatprep.subr.bf16.mxu0 0
        %338 = vmatpush1.bf16.msra.mxu0 0
        %339 = vmatprep.subr.bf16.mxu0 0
        %340 = vmatpush1.bf16.msra.mxu0 0
        %341 = vmatprep.subr.bf16.mxu0 0
        %342 = vmatpush1.bf16.msra.mxu0 0
        %343 = vmatprep.subr.bf16.mxu0 0
        %344 = vmatpush1.bf16.msra.mxu0 0
        %345 = vmatprep.subr.bf16.mxu0 0
        %346 = vmatpush1.bf16.msra.mxu0 0
        %347 = vmatprep.subr.bf16.mxu0 0
        %348 = vmatpush1.bf16.msra.mxu0 0
        %349 = vmatprep.subr.bf16.mxu0 0
        %350 = vmatpush1.bf16.msra.mxu0 0
        %351 = vmatprep.subr.bf16.mxu0 0
        %352 = vmatpush1.bf16.msra.mxu0 0
        %353 = vmatprep.subr.bf16.mxu0 0
        %354 = vmatpush1.bf16.msra.mxu0 0
        %355 = vmatprep.subr.bf16.mxu0 0
        %356 = vmatpush1.bf16.msra.mxu0 0
        %357 = vmatprep.subr.bf16.mxu0 0
        %358 = vmatpush1.bf16.msra.mxu0 0
        %359 = vmatprep.mubr.bf16.mxu0 0
        %360 = vmatmul.mubr.bf16.gmra.mrb[0].mxu0 %v282
        %v361 = vpop.f32.mrb[0].mxu0
        %v362 = vadd.f32 %v248, %v361
        %v363 = vpop.f32.mrb[0].mxu0
        %v364 = vadd.f32 %v248, %v363
        %v365 = vpop.f32.mrb[0].mxu0
        %v366 = vadd.f32 %v253, %v365
        %v367 = vpop.f32.mrb[0].mxu0
        %v368 = vadd.f32 %v253, %v367
        %369 = vdwg.mxu0
        %v370 = vmax.f32 %v319, 0.0
        %v371 = vmax.f32 %v321, 0.0
        %v372 = vmax.f32 %v362, 0.0
        %v373 = vmax.f32 %v364, 0.0
        %v374 = vmax.f32 %v323, 0.0
        %v375 = vmax.f32 %v325, 0.0
        %v376 = vmax.f32 %v366, 0.0
        %v377 = vmax.f32 %v368, 0.0
        %v378 = vpack.c.bf16 %v374, %v370
        %v379 = vpack.c.bf16 %v375, %v371
        %v380 = vpack.c.bf16 %v376, %v372
        %v381 = vpack.c.bf16 %v377, %v373
        %v386 = vunpack.c.l.b16 %v378
        %v387 = vunpack.c.l.b16 %v379
        %v388 = vunpack.c.l.b16 %v380
        %v389 = vunpack.c.l.b16 %v381
        %v390 = vunpack.c.h.b16 %v378
        %v391 = vunpack.c.h.b16 %v379
        %v392 = vunpack.c.h.b16 %v380
        %v393 = vunpack.c.h.b16 %v381
        %v394 = vpack.c.b16 %v387, %v386
        %v395 = vpack.c.b16 %v389, %v388
        %v396 = vpack.c.b16 %v391, %v390
        %v397 = vpack.c.b16 %v393, %v392
        %402 = vst [vmem:[%s233] sm:$0xff] %v394
        %403 = vst [vmem:[%s233 + $0x8] sm:$0xff] %v395
        %404 = vst [vmem:[%s233 + $0x10] sm:$0xff] %v396
        %405 = vst [vmem:[%s233 + $0x18] sm:$0xff] %v397
        %s406 = sand.u32 %s111, 1
        %s407 = scalar_lea.sflag [#allocation4], %s406
        %s408 = sand.u32 %s111, 1
        %s409 = smul.addr %s408, 32
        %s410 = scalar_lea.vmem [#allocation8], %s409
        // Predicated region
        $region45: #{tpu_custom_call.1} parent=31 // pred_check
          %p411 = pneg %p121
        $region46: #{tpu_custom_call.1} parent=31 // pred_check_branch
          %413 = sbr.rel (%p411) target = $region48
        $region47: #{tpu_custom_call.1} parent=31 // pred_region
          %s414 = smul.u32 4, %s24
          %s416 = ssub.s32 512, 512
          %417 = vsyncadd %s407, %s416
          %s418 = smul.addr %s23, 16
          %s419 = sadd.s32 %s414, %s418
          %s420 = smul.addr %s419, 64
          %s421 = scalar_lea.hbm %s3, %s420
          %s422 = sshll.u32 %s410, 4
          %s423 = int_to_ptr.vmem [resolvable:$true] %s422
          %428 = dma.vmem_to_hbm [thread:$0]  %s423, 512, %s421, %s407, 256, 512, 16
        $region48: #{tpu_custom_call.1} parent=31 // pred_fallthru
          _
      $region32: #{tpu_custom_call.1} parent=5 // pred_fallthru
        _
      %p429 = scmp.le.s32.totalorder 2, %s14
      // Predicated region
      $region49: #{tpu_custom_call.1} parent=5 // pred_check
        %p430 = pneg %p429
      $region50: #{tpu_custom_call.1} parent=5 // pred_check_branch
        %432 = sbr.rel (%p430) target = $region52
      $region51: #{tpu_custom_call.1} parent=5 // pred_region
        %s433 = ssub.s32 %s14, 2
        // Predicated region
        $region53: #{tpu_custom_call.1} parent=51 // pred_check
          %p434 = pneg %p127
        $region54: #{tpu_custom_call.1} parent=51 // pred_check_branch
          %436 = sbr.rel (%p434) target = $region56
        $region55: #{tpu_custom_call.1} parent=51 // pred_region
          %s437 = sand.u32 %s112, 1
          %s438 = scalar_lea.sflag [#allocation4], %s437
          %s439 = sand.u32 %s112, 1
          %s440 = smul.addr %s439, 32
          %s441 = scalar_lea.vmem [#allocation8], %s440
          %442 = dma.done %s438, 512
        $region56: #{tpu_custom_call.1} parent=51 // pred_fallthru
          _
      $region52: #{tpu_custom_call.1} parent=5 // pred_fallthru
        _
    $region6: #{tpu_custom_call.1} parent=1 // loop_footer
      %s18 = sadd.s32 1, %s14
    $region7: #{tpu_custom_call.1} parent=1 // loop_footer_branch
      %13 = sbr.rel target = $region3
    $region8: #{tpu_custom_call.1} parent=1 // loop_exit
      _
    %443 = vsyncpa [#allocation3], 1
    %s444 = scalar_lea.sflag [#allocation3], 1
    %445 = vsyncpa %s444, 1
    %446 = vsyncpa [#allocation6], 1
    %447 = vsyncpa [#allocation4], 1
    %s448 = scalar_lea.sflag [#allocation4], 1
    %449 = vsyncpa %s448, 1

</llo_original>
